<compile_context>
chip_gen: v5e
topology: v5e:2x2
jax: 0.10.0
libtpu: 0.0.40
codegen_flags: <defaults>
</compile_context>

<pallas_src>
import jax
import jax.numpy as jnp
import numpy as np
from jax.experimental import pallas as pl
from jax.experimental.pallas import tpu as pltpu

H = 10                       # LSTM hidden size per direction
GATE_COLS = 3 * 128          # [ i | g | o ], one 128-lane block per gate type
# combo-table row layout (128-aligned segments -> clean MXU K passes)
P_OFF, P_NUM = 0, 100        # percent_emb rows
M_OFF, M_NUM = 128, 700      # modelid_emb rows
L_OFF, L_NUM = 896, 60       # LSTM-feature rows
COMBO_ROWS = 1024            # 8 * 128
COMBO_COLS = 40              # [ W_fc1_top (0:20) | colsum(W_h1) - W_h1 (20:40) ]
HI = jax.lax.Precision.HIGHEST


# ---------------------------------------------------------------------------
# Pallas kernel: the entire forward pass in one invocation
# ---------------------------------------------------------------------------
def scheduler_kernel(ids_ref, xin_ref, wg_ref, combo_ref, small_ref, out_ref):
    f32 = jnp.float32
    B = out_ref.shape[0]

    # --- all six single-step LSTM directions: ONE fused gate matmul ---------
    # xin = [input0 | input1 | l | 1];  wg rows = [w1 ; w2 ; w_l ; bias]
    gates = jnp.dot(xin_ref[...], wg_ref[...], preferred_element_type=f32)  # (B,384)
    i_g = jax.nn.sigmoid(gates[:, 0:128])        # vreg-aligned slices (free)
    g_g = jnp.tanh(gates[:, 128:256])
    o_g = jax.nn.sigmoid(gates[:, 256:384])
    # padding lanes have gate pre-activation 0 -> h == 0 there exactly.
    h6 = o_g * jnp.tanh(i_g * g_g)               # (B,128) = [g1f|g1b|g2f|g2b|lf|lb|0]

    # --- single fused combo matmul: one-hot(embeddings) ++ LSTM hidden ------
    pt = ids_ref[:, 0:1]
    mid = ids_ref[:, 1:2]
    lane = jax.lax.broadcasted_iota(jnp.int32, (B, 896), 1)
    target = jnp.where(lane < 128, pt, mid + 128)
    onehot = jnp.where(lane == target, jnp.float32(1.0), jnp.float32(0.0))
    lhs = jnp.concatenate([onehot, h6], axis=1)                   # (B,1024)

    xw = jnp.dot(lhs, combo_ref[...], preferred_element_type=f32)  # (B,40)
    # xw[:, 0:20]  = x @ W_fc1[:85]
    # xw[:, 20:40] = sum(x) * colsum(W_h1) - x @ W_h1   (deepsets numerator)

    inv_bm1 = jnp.float32(1.0 / (B - 1))
    # lanes 0:20 of h1 are junk; they hit the zero rows of small[0:20] below.
    h1 = jnp.tanh(xw * inv_bm1 + small_ref[40:41, :])              # (B,40)
    hz = jnp.dot(h1, small_ref[0:40, 0:20],
                 preferred_element_type=f32)                       # (B,20) at lane 0
    z = jnp.tanh(xw[:, 0:20] + hz + small_ref[41:42, 0:20])
    # final 20->1 projection: VPU multiply + lane reduce (no 1-wide MXU pop)
    out_ref[...] = (jnp.sum(z * small_ref[42:43, 0:20], axis=1, keepdims=True)
                    + small_ref[43:44, 0:1])


# ---------------------------------------------------------------------------
# Raw ("PyTorch-like") parameters, deterministic & synthetic
# ---------------------------------------------------------------------------
def init_raw_params(key, N):
    names_shapes = [
        ("percent_emb", (100, 5)),
        ("modelid_emb", (700, 20)),
        # single-step bidirectional LSTMs: W_ih^T stored as (in, 4H), PyTorch
        # gate order [i|f|g|o]; biases are the combined b_ih + b_hh.  W_hh is
        # mathematically irrelevant (h0 == 0 for a length-1 sequence).
        ("w_g1f", (N, 4 * H)), ("b_g1f", (1, 4 * H)),
        ("w_g1b", (N, 4 * H)), ("b_g1b", (1, 4 * H)),
        ("w_g2f", (N, 4 * H)), ("b_g2f", (1, 4 * H)),
        ("w_g2b", (N, 4 * H)), ("b_g2b", (1, 4 * H)),
        ("w_lf", (1, 4 * H)), ("b_lf", (1, 4 * H)),
        ("w_lb", (1, 4 * H)), ("b_lb", (1, 4 * H)),
        # deepsets h: Linear(85,20) -> Tanh -> Linear(20,10); fc1/fc2
        ("w_h1", (85, 20)), ("b_h1", (1, 20)),
        ("w_h2", (20, 10)), ("b_h2", (1, 10)),
        ("w_fc1", (95, 20)), ("b_fc1", (1, 20)),
        ("w_fc2", (20, 1)), ("b_fc2", (1, 1)),
    ]
    params = {}
    keys = jax.random.split(key, len(names_shapes))
    for k, (name, shape) in zip(keys, names_shapes):
        params[name] = (0.1 * jax.random.normal(k, shape)).astype(jnp.float32)
    return params


# ---------------------------------------------------------------------------
# Host-side (one-time) packing / pre-composition of the kernel parameters
# ---------------------------------------------------------------------------
def pack_params(raw, N):
    f32 = jnp.float32

    # ---- fused gate matrix: rows [w_g1 (N) ; w_g2 (N) ; w_l (1) ; bias (1)],
    #      columns [i|g|o] blocks, 10 lanes per direction at slots 0..50 ------
    def place(dst, w, row, slot):
        k = w.shape[0]
        dst = dst.at[row:row + k, 0 * 128 + slot:0 * 128 + slot + H].set(w[:, 0:H])          # i
        dst = dst.at[row:row + k, 1 * 128 + slot:1 * 128 + slot + H].set(w[:, 2 * H:3 * H])  # g
        dst = dst.at[row:row + k, 2 * 128 + slot:2 * 128 + slot + H].set(w[:, 3 * H:4 * H])  # o
        return dst

    wg = jnp.zeros((2 * N + 2, GATE_COLS), f32)
    for name, row, slot in (("w_g1f", 0, 0), ("w_g1b", 0, 10),
                            ("w_g2f", N, 20), ("w_g2b", N, 30),
                            ("w_lf", 2 * N, 40), ("w_lb", 2 * N, 50),
                            ("b_g1f", 2 * N + 1, 0), ("b_g1b", 2 * N + 1, 10),
                            ("b_g2f", 2 * N + 1, 20), ("b_g2b", 2 * N + 1, 30),
                            ("b_lf", 2 * N + 1, 40), ("b_lb", 2 * N + 1, 50)):
        wg = place(wg, raw[name], row, slot)

    # ---- fused 1024-row combo table ----------------------------------------
    wh1, wfc1 = raw["w_h1"], raw["w_fc1"]
    colsum = jnp.sum(wh1, axis=0, keepdims=True)                   # (1,20)

    def seg(rows_h1, rows_fc1):
        k = rows_h1.shape[0]
        return jnp.concatenate(
            [rows_fc1, jnp.broadcast_to(colsum, (k, 20)) - rows_h1], axis=1)  # (k,40)

    combo = jnp.zeros((COMBO_ROWS, COMBO_COLS), f32)
    combo = combo.at[P_OFF:P_OFF + P_NUM].set(
        jnp.dot(raw["percent_emb"], seg(wh1[0:5], wfc1[0:5]), precision=HI))
    combo = combo.at[M_OFF:M_OFF + M_NUM].set(
        jnp.dot(raw["modelid_emb"], seg(wh1[5:25], wfc1[5:25]), precision=HI))
    combo = combo.at[L_OFF:L_OFF + L_NUM].set(seg(wh1[25:85], wfc1[25:85]))

    # ---- small tail parameters ----------------------------------------------
    w_h2fc1 = jnp.dot(raw["w_h2"], wfc1[85:95], precision=HI)       # (20,20)
    b_fc1c = raw["b_fc1"] + jnp.dot(raw["b_h2"], wfc1[85:95], precision=HI)

    small = jnp.zeros((48, 40), f32)
    small = small.at[20:40, 0:20].set(w_h2fc1)      # rows 0:20 stay 0 (kill junk lanes)
    small = small.at[40, 20:40].set(raw["b_h1"][0])         # aligned with xw[:,20:40]
    small = small.at[41, 0:20].set(b_fc1c[0])                # b_fc1 + b_h2 @ W_fc1[85:]
    small = small.at[42, 0:20].set(raw["w_fc2"][:, 0])
    small = small.at[43, 0].set(raw["b_fc2"][0, 0])
    return {"wg": wg, "combo": combo, "small": small}


# ---------------------------------------------------------------------------
# Wrapper: a single pallas_call, 5 VMEM inputs, no wrapper-side gathers
# ---------------------------------------------------------------------------
def scheduler_forward(l, input0, input1, pt, model_ids, packed):
    B = l.shape[0]
    f32 = jnp.float32
    ids = jnp.stack([pt.astype(jnp.int32), model_ids.astype(jnp.int32)], axis=1)
    xin = jnp.concatenate([input0.astype(f32), input1.astype(f32),
                           l.reshape(B, 1).astype(f32),
                           jnp.ones((B, 1), f32)], axis=1)          # (B, 2N+2)
    vmem = pl.BlockSpec(memory_space=pltpu.MemorySpace.VMEM)
    return pl.pallas_call(
        scheduler_kernel,
        out_shape=jax.ShapeDtypeStruct((B, 1), jnp.float32),
        in_specs=[vmem] * 5,
        out_specs=vmem,
    )(ids, xin, packed["wg"], packed["combo"], packed["small"])


# ---------------------------------------------------------------------------
# Pure-JAX reference mirroring the PyTorch forward() (uses the RAW params)
# ---------------------------------------------------------------------------
def scheduler_reference(l, input0, input1, pt, model_ids, p):
    def step(gates):
        i = jax.nn.sigmoid(gates[:, 0:H])
        g = jnp.tanh(gates[:, 2 * H:3 * H])
        o = jax.nn.sigmoid(gates[:, 3 * H:4 * H])
        return o * jnp.tanh(i * g)

    def bilstm(x, wf, bf, wb, bb):
        return jnp.concatenate([step(x @ wf + bf), step(x @ wb + bb)], axis=1)

    B = l.shape[0]
    x_percent = jnp.take(p["percent_emb"], pt, axis=0)
    modelid = jnp.take(p["modelid_emb"], model_ids, axis=0)
    g1 = bilstm(input0, p["w_g1f"], p["b_g1f"], p["w_g1b"], p["b_g1b"])
    g2 = bilstm(input1, p["w_g2f"], p["b_g2f"], p["w_g2b"], p["b_g2b"])
    lo = bilstm(l.reshape(B, 1), p["w_lf"], p["b_lf"], p["w_lb"], p["b_lb"])
    x = jnp.concatenate([x_percent, modelid, g1, g2, lo], axis=1)
    x_c = (jnp.sum(x, axis=1, keepdims=True) - x) / (B - 1)
    x_c_map = jnp.tanh(x_c @ p["w_h1"] + p["b_h1"]) @ p["w_h2"] + p["b_h2"]
    x_full = jnp.concatenate([x, x_c_map], axis=1)
    z = jnp.tanh(x_full @ p["w_fc1"] + p["b_fc1"])
    return z @ p["w_fc2"] + p["b_fc2"]


if __name__ == "__main__":
    B = 8   # number of candidate tasks
    N = 4   # len(grad_indexes) -> width of the layer-wise grad-cosine features

    key = jax.random.PRNGKey(0)
    kp, k1, k2, k3, k4, k5 = jax.random.split(key, 6)
    raw = init_raw_params(kp, N)
    packed = pack_params(raw, N)            # one-time host-side packing

    l = jax.random.uniform(k1, (B,), dtype=jnp.float32)          # task losses
    input0 = jax.random.normal(k2, (B, N), dtype=jnp.float32)    # task-pair grad cos
    input1 = jax.random.normal(k3, (B, N), dtype=jnp.float32)    # train/val grad cos
    pt = jax.random.randint(k4, (B,), 0, 100, dtype=jnp.int32)   # percent ids
    model_ids = jax.random.randint(k5, (B,), 0, 700, dtype=jnp.int32)

    fwd = jax.jit(scheduler_forward)
    out = jax.block_until_ready(fwd(l, input0, input1, pt, model_ids, packed))

    ref = scheduler_reference(l, input0, input1, pt, model_ids, raw)
    np.testing.assert_allclose(np.asarray(out), np.asarray(ref),
                               rtol=1e-4, atol=1e-5)
    assert out.shape == (B, 1)
    print("KERNEL_OK")
</pallas_src>

<mosaic_0001>
module attributes {stable_mosaic.version = 11 : i64} {
  func.func @scheduler_kernel(%arg0: memref<8x2xi32, #tpu.memory_space<vmem>>, %arg1: memref<8x10xf32, #tpu.memory_space<vmem>>, %arg2: memref<10x384xf32, #tpu.memory_space<vmem>>, %arg3: memref<1024x40xf32, #tpu.memory_space<vmem>>, %arg4: memref<48x40xf32, #tpu.memory_space<vmem>>, %arg5: memref<8x1xf32, #tpu.memory_space<vmem>>) attributes {dimension_semantics = [], scalar_prefetch = 0 : i64, scratch_operands = 0 : i64, tpu.core_type = #tpu.core_type<tc>} {
    %c0 = arith.constant 0 : index
    %c0_0 = arith.constant 0 : index
    %0 = vector.load %arg1[%c0, %c0_0] : memref<8x10xf32, #tpu.memory_space<vmem>>, vector<8x10xf32>
    %c0_1 = arith.constant 0 : index
    %c0_2 = arith.constant 0 : index
    %1 = vector.load %arg2[%c0_1, %c0_2] : memref<10x384xf32, #tpu.memory_space<vmem>>, vector<10x384xf32>
    %cst = arith.constant dense<0.000000e+00> : vector<8x384xf32>
    %2 = tpu.matmul %0, %1, %cst {dimension_numbers = #tpu.dot_dimension_numbers<[1], [0], [0], [1], [0, 0, 1, 1], [], []>} : vector<8x10xf32>, vector<10x384xf32>, vector<8x384xf32> -> vector<8x384xf32>
    %3 = vector.extract_strided_slice %2 {offsets = [0, 0], sizes = [8, 128], strides = [1, 1]} : vector<8x384xf32> to vector<8x128xf32>
    %4 = arith.negf %3 : vector<8x128xf32>
    %5 = math.exp %4 : vector<8x128xf32>
    %cst_3 = arith.constant 1.000000e+00 : f32
    %6 = vector.broadcast %cst_3 : f32 to vector<8x128xf32>
    %7 = arith.addf %6, %5 : vector<8x128xf32>
    %8 = arith.divf %6, %7 : vector<8x128xf32>
    %9 = vector.extract_strided_slice %2 {offsets = [0, 128], sizes = [8, 128], strides = [1, 1]} : vector<8x384xf32> to vector<8x128xf32>
    %10 = math.tanh %9 : vector<8x128xf32>
    %11 = vector.extract_strided_slice %2 {offsets = [0, 256], sizes = [8, 128], strides = [1, 1]} : vector<8x384xf32> to vector<8x128xf32>
    %12 = arith.negf %11 : vector<8x128xf32>
    %13 = math.exp %12 : vector<8x128xf32>
    %cst_4 = arith.constant 1.000000e+00 : f32
    %14 = vector.broadcast %cst_4 : f32 to vector<8x128xf32>
    %15 = arith.addf %14, %13 : vector<8x128xf32>
    %16 = arith.divf %14, %15 : vector<8x128xf32>
    %17 = arith.mulf %8, %10 : vector<8x128xf32>
    %18 = math.tanh %17 : vector<8x128xf32>
    %19 = arith.mulf %16, %18 : vector<8x128xf32>
    %c0_5 = arith.constant 0 : index
    %c0_6 = arith.constant 0 : index
    %20 = vector.load %arg0[%c0_5, %c0_6] : memref<8x2xi32, #tpu.memory_space<vmem>>, vector<8x1xi32>
    %c0_7 = arith.constant 0 : index
    %c1 = arith.constant 1 : index
    %21 = vector.load %arg0[%c0_7, %c1] : memref<8x2xi32, #tpu.memory_space<vmem>>, vector<8x1xi32>
    %22 = tpu.iota {dimensions = array<i32: 1>} : vector<8x896xi32>
    %c128_i32 = arith.constant 128 : i32
    %23 = vector.broadcast %c128_i32 : i32 to vector<8x896xi32>
    %24 = arith.cmpi slt, %22, %23 : vector<8x896xi32>
    %c128_i32_8 = arith.constant 128 : i32
    %25 = vector.broadcast %c128_i32_8 : i32 to vector<8x1xi32>
    %26 = arith.addi %21, %25 : vector<8x1xi32>
    %27 = vector.shape_cast %20 : vector<8x1xi32> to vector<8x1xi32>
    %28 = vector.broadcast %27 : vector<8x1xi32> to vector<8x896xi32>
    %29 = vector.shape_cast %26 : vector<8x1xi32> to vector<8x1xi32>
    %30 = vector.broadcast %29 : vector<8x1xi32> to vector<8x896xi32>
    %31 = arith.select %24, %28, %30 : vector<8x896xi1>, vector<8x896xi32>
    %32 = arith.cmpi eq, %22, %31 : vector<8x896xi32>
    %cst_9 = arith.constant 1.000000e+00 : f32
    %cst_10 = arith.constant 0.000000e+00 : f32
    %33 = vector.broadcast %cst_9 : f32 to vector<8x896xf32>
    %34 = vector.broadcast %cst_10 : f32 to vector<8x896xf32>
    %35 = arith.select %32, %33, %34 : vector<8x896xi1>, vector<8x896xf32>
    %36 = tpu.concatenate %35, %19 in 1 : vector<8x896xf32>, vector<8x128xf32> -> vector<8x1024xf32>
    %c0_11 = arith.constant 0 : index
    %c0_12 = arith.constant 0 : index
    %37 = vector.load %arg3[%c0_11, %c0_12] : memref<1024x40xf32, #tpu.memory_space<vmem>>, vector<1024x40xf32>
    %cst_13 = arith.constant dense<0.000000e+00> : vector<8x40xf32>
    %38 = tpu.matmul %36, %37, %cst_13 {dimension_numbers = #tpu.dot_dimension_numbers<[1], [0], [0], [1], [0, 0, 1, 1], [], []>} : vector<8x1024xf32>, vector<1024x40xf32>, vector<8x40xf32> -> vector<8x40xf32>
    %cst_14 = arith.constant 0.142857149 : f32
    %39 = vector.broadcast %cst_14 : f32 to vector<8x40xf32>
    %40 = arith.mulf %38, %39 : vector<8x40xf32>
    %c40 = arith.constant 40 : index
    %c0_15 = arith.constant 0 : index
    %41 = vector.load %arg4[%c40, %c0_15] : memref<48x40xf32, #tpu.memory_space<vmem>>, vector<1x40xf32>
    %42 = vector.broadcast %41 : vector<1x40xf32> to vector<8x40xf32>
    %43 = arith.addf %40, %42 : vector<8x40xf32>
    %44 = math.tanh %43 : vector<8x40xf32>
    %c0_16 = arith.constant 0 : index
    %c0_17 = arith.constant 0 : index
    %45 = vector.load %arg4[%c0_16, %c0_17] : memref<48x40xf32, #tpu.memory_space<vmem>>, vector<40x20xf32>
    %cst_18 = arith.constant dense<0.000000e+00> : vector<8x20xf32>
    %46 = tpu.matmul %44, %45, %cst_18 {dimension_numbers = #tpu.dot_dimension_numbers<[1], [0], [0], [1], [0, 0, 1, 1], [], []>} : vector<8x40xf32>, vector<40x20xf32>, vector<8x20xf32> -> vector<8x20xf32>
    %47 = vector.extract_strided_slice %38 {offsets = [0, 0], sizes = [8, 20], strides = [1, 1]} : vector<8x40xf32> to vector<8x20xf32>
    %48 = arith.addf %47, %46 : vector<8x20xf32>
    %c41 = arith.constant 41 : index
    %c0_19 = arith.constant 0 : index
    %49 = vector.load %arg4[%c41, %c0_19] : memref<48x40xf32, #tpu.memory_space<vmem>>, vector<1x20xf32>
    %50 = vector.broadcast %49 : vector<1x20xf32> to vector<8x20xf32>
    %51 = arith.addf %48, %50 : vector<8x20xf32>
    %52 = math.tanh %51 : vector<8x20xf32>
    %c42 = arith.constant 42 : index
    %c0_20 = arith.constant 0 : index
    %53 = vector.load %arg4[%c42, %c0_20] : memref<48x40xf32, #tpu.memory_space<vmem>>, vector<1x20xf32>
    %54 = vector.broadcast %53 : vector<1x20xf32> to vector<8x20xf32>
    %55 = arith.mulf %52, %54 : vector<8x20xf32>
    %cst_21 = arith.constant dense<0.000000e+00> : vector<8xf32>
    %56 = vector.multi_reduction <add>, %55, %cst_21 [1] : vector<8x20xf32> to vector<8xf32>
    %57 = vector.shape_cast %56 : vector<8xf32> to vector<8x1xf32>
    %c43 = arith.constant 43 : index
    %c0_22 = arith.constant 0 : index
    %58 = vector.load %arg4[%c43, %c0_22] : memref<48x40xf32, #tpu.memory_space<vmem>>, vector<1x1xf32>
    %59 = vector.broadcast %58 : vector<1x1xf32> to vector<8x1xf32>
    %60 = arith.addf %57, %59 : vector<8x1xf32>
    %c0_23 = arith.constant 0 : index
    %c0_24 = arith.constant 0 : index
    %61 = vector.load %arg5[%c0_23, %c0_24] : memref<8x1xf32, #tpu.memory_space<vmem>>, vector<8x1xf32>
    tpu.vector_store %arg5[%c0_23, %c0_24], %60 {strides = array<i32>} : memref<8x1xf32, #tpu.memory_space<vmem>>, vector<8x1xf32>,
    return
  }
}

</mosaic_0001>

<llo_original>
// kernel: scheduler_forward.1
$region0: #{scheduler_forward.1}
  #allocation0 [shape = 'u32[]', space=smem, size = 0x4, offset = 0x4, fixed_abs, tag = 'smem constant byte address 0x4 - core index']
  #allocation1 [shape = 'u32[72,128]{1,0:T(1,128)}', space=vmem, size = 0x9000, scoped, tag = 'internal scratch']
  %s0 = inlined_call_operand.vmem [shape: s32[8,2], index: 0, kind: input, shape index: {}]
  %s1 = inlined_call_operand.vmem [shape: f32[8,10], index: 1, kind: input, shape index: {}]
  %s2 = inlined_call_operand.vmem [shape: f32[10,384], index: 2, kind: input, shape index: {}]
  %s3 = inlined_call_operand.vmem [shape: f32[1024,40], index: 3, kind: input, shape index: {}]
  %s4 = inlined_call_operand.vmem [shape: f32[48,40], index: 4, kind: input, shape index: {}]
  %s5 = inlined_call_operand.vmem [shape: f32[8,1], index: 5, kind: output, shape index: {}]
  %s6 = sld [smem:[#allocation0]]
  $region30: #{scheduler_forward.1} parent=0
    _
  %s8 = ssub.s32 1, %s6
  %s9 = scalar_select 0, %s8, %s6
  // Predicated region
  $region2: #{scheduler_forward.1} parent=0 // pred_check
    _
  $region3: #{scheduler_forward.1} parent=0 // pred_check_branch
    %11 = sbr.rel (0) target = $region5
  $region4: #{scheduler_forward.1} parent=0 // pred_region
    _
  $region5: #{scheduler_forward.1} parent=0 // pred_fallthru
    _
  // Predicated region
  $region6: #{scheduler_forward.1} parent=0 // pred_check
    _
  $region7: #{scheduler_forward.1} parent=0 // pred_check_branch
    %13 = sbr.rel (0) target = $region9
  $region8: #{scheduler_forward.1} parent=0 // pred_region
    _
  $region9: #{scheduler_forward.1} parent=0 // pred_fallthru
    _
  // Predicated region
  $region10: #{scheduler_forward.1} parent=0 // pred_check
    _
  $region11: #{scheduler_forward.1} parent=0 // pred_check_branch
    %15 = sbr.rel (0) target = $region13
  $region12: #{scheduler_forward.1} parent=0 // pred_region
    _
  $region13: #{scheduler_forward.1} parent=0 // pred_fallthru
    _
  // Predicated region
  $region14: #{scheduler_forward.1} parent=0 // pred_check
    _
  $region15: #{scheduler_forward.1} parent=0 // pred_check_branch
    %17 = sbr.rel (0) target = $region17
  $region16: #{scheduler_forward.1} parent=0 // pred_region
    _
  $region17: #{scheduler_forward.1} parent=0 // pred_fallthru
    _
  // Predicated region
  $region18: #{scheduler_forward.1} parent=0 // pred_check
    _
  $region19: #{scheduler_forward.1} parent=0 // pred_check_branch
    %19 = sbr.rel (0) target = $region21
  $region20: #{scheduler_forward.1} parent=0 // pred_region
    _
  $region21: #{scheduler_forward.1} parent=0 // pred_fallthru
    _
  %v20 = vld [vmem:[%s1] sm:$0xff]
  %v21 = vld [vmem:[%s2] sm:$0xff]
  %v22 = vld [vmem:[%s2 + $0x8] sm:$0xff]
  %v23 = vld [vmem:[%s2 + $0x10] sm:$0xff]
  %v24 = vld [vmem:[%s2 + $0x18] sm:$0x3]
  %v25 = vld [vmem:[%s2 + $0x20] sm:$0x3]
  %v26 = vld [vmem:[%s2 + $0x28] sm:$0x3]
  %vm27 = vcmask 80896
  %v29 = vsel %vm27, %v20, 0
  %vm31 = vcmask 1041408
  %v33 = vsel %vm31, %v24, 0
  %v36 = vsel %vm31, %v25, 0
  %v39 = vsel %vm31, %v26, 0
  %41 = vmatpush.msra.mxu0 0.0
  %42 = vmatpush.msra.mxu0 0.0
  %43 = vmatpush.msra.mxu0 0.0
  %44 = vmatpush.msra.mxu0 0.0
  %45 = vmatpush.msra.mxu0 0.0
  %46 = vmatpush.msra.mxu0 0.0
  %47 = vmatpush.msra.mxu0 0.0
  %48 = vmatpush.msra.mxu0 0.0
  %49 = vmatpush.msra.mxu0 0.0
  %50 = vmatpush.msra.mxu0 0.0
  %51 = vmatpush.msra.mxu0 0.0
  %52 = vmatpush.msra.mxu0 0.0
  %53 = vmatpush.msra.mxu0 0.0
  %54 = vmatpush.msra.mxu0 0.0
  %55 = vmatpush.msra.mxu0 %v33
  %56 = vmatpush.msra.mxu0 %v21
  %57 = vmatmul.f32.gmra.mxu0 %v29
  %v58 = vpop.f32.mrf.mxu0
  %v59 = vadd.f32 0.0, %v58
  %60 = vdwg.mxu0
  %61 = vmatpush.msra.mxu0 0.0
  %62 = vmatpush.msra.mxu0 0.0
  %63 = vmatpush.msra.mxu0 0.0
  %64 = vmatpush.msra.mxu0 0.0
  %65 = vmatpush.msra.mxu0 0.0
  %66 = vmatpush.msra.mxu0 0.0
  %67 = vmatpush.msra.mxu0 0.0
  %68 = vmatpush.msra.mxu0 0.0
  %69 = vmatpush.msra.mxu0 0.0
  %70 = vmatpush.msra.mxu0 0.0
  %71 = vmatpush.msra.mxu0 0.0
  %72 = vmatpush.msra.mxu0 0.0
  %73 = vmatpush.msra.mxu0 0.0
  %74 = vmatpush.msra.mxu0 0.0
  %75 = vmatpush.msra.mxu0 %v36
  %76 = vmatpush.msra.mxu0 %v22
  %77 = vmatmul.f32.gmra.mxu0 %v29
  %v78 = vpop.f32.mrf.mxu0
  %v79 = vadd.f32 0.0, %v78
  %80 = vdwg.mxu0
  %81 = vmatpush.msra.mxu0 0.0
  %82 = vmatpush.msra.mxu0 0.0
  %83 = vmatpush.msra.mxu0 0.0
  %84 = vmatpush.msra.mxu0 0.0
  %85 = vmatpush.msra.mxu0 0.0
  %86 = vmatpush.msra.mxu0 0.0
  %87 = vmatpush.msra.mxu0 0.0
  %88 = vmatpush.msra.mxu0 0.0
  %89 = vmatpush.msra.mxu0 0.0
  %90 = vmatpush.msra.mxu0 0.0
  %91 = vmatpush.msra.mxu0 0.0
  %92 = vmatpush.msra.mxu0 0.0
  %93 = vmatpush.msra.mxu0 0.0
  %94 = vmatpush.msra.mxu0 0.0
  %95 = vmatpush.msra.mxu0 %v39
  %96 = vmatpush.msra.mxu0 %v23
  %97 = vmatmul.f32.gmra.mxu0 %v29
  %v98 = vpop.f32.mrf.mxu0
  %v99 = vadd.f32 0.0, %v98
  %100 = vdwg.mxu0
  %v101 = vxor.u32 %v59, 2147483648
  %v102 = vmul.f32 %v101, 1.442695
  %v103 = vpow.pop %v102
  %v104 = vadd.f32 %v103, 1.0
  %v105 = vrcp.pop %v104
  %v106 = vmul.f32 %v104, %v105
  %v107 = vsub.f32 1.0, %v106
  %v108 = vmul.f32 %v105, %v107
  %v109 = vadd.f32 %v105, %v108
  %vm110 = vweird.f32 %v104
  %vm111 = vweird.f32 %v105
  %vm112 = vmor %vm110, %vm111
  %v113 = vsel %vm112, %v105, %v109
  %v114 = vand.u32 2147483647, %v104
  %vm115 = vcmp.eq.f32.partialorder %v114, 8.507059e+37
  %v116 = vand.u32 %v104, 2147483648
  %v117 = vor.u32 1.1754944e-38, %v116
  %v118 = vsel %vm115, %v117, %v113
  %v119 = vmul.f32 1.0, %v118
  %v120 = vtanh.pop %v79
  %v121 = vxor.u32 %v99, 2147483648
  %v122 = vmul.f32 %v121, 1.442695
  %v123 = vpow.pop %v122
  %v124 = vadd.f32 %v123, 1.0
  %v125 = vrcp.pop %v124
  %v126 = vmul.f32 %v124, %v125
  %v127 = vsub.f32 1.0, %v126
  %v128 = vmul.f32 %v125, %v127
  %v129 = vadd.f32 %v125, %v128
  %vm130 = vweird.f32 %v124
  %vm131 = vweird.f32 %v125
  %vm132 = vmor %vm130, %vm131
  %v133 = vsel %vm132, %v125, %v129
  %v134 = vand.u32 2147483647, %v124
  %vm135 = vcmp.eq.f32.partialorder %v134, 8.507059e+37
  %v136 = vand.u32 %v124, 2147483648
  %v137 = vor.u32 1.1754944e-38, %v136
  %v138 = vsel %vm135, %v137, %v133
  %v139 = vmul.f32 1.0, %v138
  %v140 = vmul.f32 %v119, %v120
  %v141 = vtanh.pop %v140
  %v142 = vmul.f32 %v139, %v141
  %v143 = vld [vmem:[%s0] sm:$0xff]
  %v144 = vlaneseq
  %v145 = vand.u32 %v144, 127
  %v146 = vadd.s32 %v145, 128
  %v147 = vadd.s32 %v145, 256
  %v148 = vadd.s32 %v145, 384
  %v149 = vadd.s32 %v145, 512
  %v150 = vadd.s32 %v145, 640
  %v151 = vadd.s32 %v145, 768
  %vm152 = vcmp.lt.s32.totalorder %v145, 128
  %vm153 = vcmp.lt.s32.totalorder %v146, 128
  %vm154 = vcmp.lt.s32.totalorder %v147, 128
  %vm155 = vcmp.lt.s32.totalorder %v148, 128
  %vm156 = vcmp.lt.s32.totalorder %v149, 128
  %vm157 = vcmp.lt.s32.totalorder %v150, 128
  %vm158 = vcmp.lt.s32.totalorder %v151, 128
  %v159 = vadd.s32 %v143, 128
  %160 = vset.pattern.permute.xlu0 0
  %161 = vperm.xlu0 %160, %v143
  %v162 = vpop.permute.xlu0 %161
  %163 = vset.pattern.permute.xlu0 1
  %164 = vperm.xlu0 %163, %v159
  %v165 = vpop.permute.xlu0 %164
  %v166 = vsel %vm152, %v162, %v165
  %v167 = vsel %vm153, %v162, %v165
  %v168 = vsel %vm154, %v162, %v165
  %v169 = vsel %vm155, %v162, %v165
  %v170 = vsel %vm156, %v162, %v165
  %v171 = vsel %vm157, %v162, %v165
  %v172 = vsel %vm158, %v162, %v165
  %vm173 = vcmp.eq.s32.totalorder %v145, %v166
  %vm174 = vcmp.eq.s32.totalorder %v146, %v167
  %vm175 = vcmp.eq.s32.totalorder %v147, %v168
  %vm176 = vcmp.eq.s32.totalorder %v148, %v169
  %vm177 = vcmp.eq.s32.totalorder %v149, %v170
  %vm178 = vcmp.eq.s32.totalorder %v150, %v171
  %vm179 = vcmp.eq.s32.totalorder %v151, %v172
  %v180 = vsel %vm173, 1.0, 0.0
  %v181 = vsel %vm174, 1.0, 0.0
  %v182 = vsel %vm175, 1.0, 0.0
  %v183 = vsel %vm176, 1.0, 0.0
  %v184 = vsel %vm177, 1.0, 0.0
  %v185 = vsel %vm178, 1.0, 0.0
  %v186 = vsel %vm179, 1.0, 0.0
  %v187 = vld [vmem:[%s3] sm:$0xff]
  %v188 = vld [vmem:[%s3 + $0x8] sm:$0xff]
  %v189 = vld [vmem:[%s3 + $0x10] sm:$0xff]
  %v190 = vld [vmem:[%s3 + $0x18] sm:$0xff]
  %v191 = vld [vmem:[%s3 + $0x20] sm:$0xff]
  %v192 = vld [vmem:[%s3 + $0x28] sm:$0xff]
  %v193 = vld [vmem:[%s3 + $0x30] sm:$0xff]
  %v194 = vld [vmem:[%s3 + $0x38] sm:$0xff]
  %v195 = vld [vmem:[%s3 + $0x40] sm:$0xff]
  %v196 = vld [vmem:[%s3 + $0x48] sm:$0xff]
  %v197 = vld [vmem:[%s3 + $0x50] sm:$0xff]
  %v198 = vld [vmem:[%s3 + $0x58] sm:$0xff]
  %v199 = vld [vmem:[%s3 + $0x60] sm:$0xff]
  %v200 = vld [vmem:[%s3 + $0x68] sm:$0xff]
  %v201 = vld [vmem:[%s3 + $0x70] sm:$0xff]
  %v202 = vld [vmem:[%s3 + $0x78] sm:$0xff]
  %v203 = vld [vmem:[%s3 + $0x80] sm:$0xff]
  %v204 = vld [vmem:[%s3 + $0x88] sm:$0xff]
  %v205 = vld [vmem:[%s3 + $0x90] sm:$0xff]
  %v206 = vld [vmem:[%s3 + $0x98] sm:$0xff]
  %v207 = vld [vmem:[%s3 + $0xa0] sm:$0xff]
  %v208 = vld [vmem:[%s3 + $0xa8] sm:$0xff]
  %v209 = vld [vmem:[%s3 + $0xb0] sm:$0xff]
  %v210 = vld [vmem:[%s3 + $0xb8] sm:$0xff]
  %v211 = vld [vmem:[%s3 + $0xc0] sm:$0xff]
  %v212 = vld [vmem:[%s3 + $0xc8] sm:$0xff]
  %v213 = vld [vmem:[%s3 + $0xd0] sm:$0xff]
  %v214 = vld [vmem:[%s3 + $0xd8] sm:$0xff]
  %v215 = vld [vmem:[%s3 + $0xe0] sm:$0xff]
  %v216 = vld [vmem:[%s3 + $0xe8] sm:$0xff]
  %v217 = vld [vmem:[%s3 + $0xf0] sm:$0xff]
  %v218 = vld [vmem:[%s3 + $0xf8] sm:$0xff]
  %v219 = vld [vmem:[%s3 + $0x100] sm:$0xff]
  %v220 = vld [vmem:[%s3 + $0x108] sm:$0xff]
  %v221 = vld [vmem:[%s3 + $0x110] sm:$0xff]
  %v222 = vld [vmem:[%s3 + $0x118] sm:$0xff]
  %v223 = vld [vmem:[%s3 + $0x120] sm:$0xff]
  %v224 = vld [vmem:[%s3 + $0x128] sm:$0xff]
  %v225 = vld [vmem:[%s3 + $0x130] sm:$0xff]
  %v226 = vld [vmem:[%s3 + $0x138] sm:$0xff]
  %v227 = vld [vmem:[%s3 + $0x140] sm:$0xff]
  %v228 = vld [vmem:[%s3 + $0x148] sm:$0xff]
  %v229 = vld [vmem:[%s3 + $0x150] sm:$0xff]
  %v230 = vld [vmem:[%s3 + $0x158] sm:$0xff]
  %v231 = vld [vmem:[%s3 + $0x160] sm:$0xff]
  %v232 = vld [vmem:[%s3 + $0x168] sm:$0xff]
  %v233 = vld [vmem:[%s3 + $0x170] sm:$0xff]
  %v234 = vld [vmem:[%s3 + $0x178] sm:$0xff]
  %v235 = vld [vmem:[%s3 + $0x180] sm:$0xff]
  %v236 = vld [vmem:[%s3 + $0x188] sm:$0xff]
  %v237 = vld [vmem:[%s3 + $0x190] sm:$0xff]
  %v238 = vld [vmem:[%s3 + $0x198] sm:$0xff]
  %v239 = vld [vmem:[%s3 + $0x1a0] sm:$0xff]
  %v240 = vld [vmem:[%s3 + $0x1a8] sm:$0xff]
  %v241 = vld [vmem:[%s3 + $0x1b0] sm:$0xff]
  %v242 = vld [vmem:[%s3 + $0x1b8] sm:$0xff]
  %v243 = vld [vmem:[%s3 + $0x1c0] sm:$0xff]
  %v244 = vld [vmem:[%s3 + $0x1c8] sm:$0xff]
  %v245 = vld [vmem:[%s3 + $0x1d0] sm:$0xff]
  %v246 = vld [vmem:[%s3 + $0x1d8] sm:$0xff]
  %v247 = vld [vmem:[%s3 + $0x1e0] sm:$0xff]
  %v248 = vld [vmem:[%s3 + $0x1e8] sm:$0xff]
  %v249 = vld [vmem:[%s3 + $0x1f0] sm:$0xff]
  %v250 = vld [vmem:[%s3 + $0x1f8] sm:$0xff]
  %v251 = vld [vmem:[%s3 + $0x200] sm:$0xff]
  %v252 = vld [vmem:[%s3 + $0x208] sm:$0xff]
  %v253 = vld [vmem:[%s3 + $0x210] sm:$0xff]
  %v254 = vld [vmem:[%s3 + $0x218] sm:$0xff]
  %v255 = vld [vmem:[%s3 + $0x220] sm:$0xff]
  %v256 = vld [vmem:[%s3 + $0x228] sm:$0xff]
  %v257 = vld [vmem:[%s3 + $0x230] sm:$0xff]
  %v258 = vld [vmem:[%s3 + $0x238] sm:$0xff]
  %v259 = vld [vmem:[%s3 + $0x240] sm:$0xff]
  %v260 = vld [vmem:[%s3 + $0x248] sm:$0xff]
  %v261 = vld [vmem:[%s3 + $0x250] sm:$0xff]
  %v262 = vld [vmem:[%s3 + $0x258] sm:$0xff]
  %v263 = vld [vmem:[%s3 + $0x260] sm:$0xff]
  %v264 = vld [vmem:[%s3 + $0x268] sm:$0xff]
  %v265 = vld [vmem:[%s3 + $0x270] sm:$0xff]
  %v266 = vld [vmem:[%s3 + $0x278] sm:$0xff]
  %v267 = vld [vmem:[%s3 + $0x280] sm:$0xff]
  %v268 = vld [vmem:[%s3 + $0x288] sm:$0xff]
  %v269 = vld [vmem:[%s3 + $0x290] sm:$0xff]
  %v270 = vld [vmem:[%s3 + $0x298] sm:$0xff]
  %v271 = vld [vmem:[%s3 + $0x2a0] sm:$0xff]
  %v272 = vld [vmem:[%s3 + $0x2a8] sm:$0xff]
  %v273 = vld [vmem:[%s3 + $0x2b0] sm:$0xff]
  %v274 = vld [vmem:[%s3 + $0x2b8] sm:$0xff]
  %v275 = vld [vmem:[%s3 + $0x2c0] sm:$0xff]
  %v276 = vld [vmem:[%s3 + $0x2c8] sm:$0xff]
  %v277 = vld [vmem:[%s3 + $0x2d0] sm:$0xff]
  %v278 = vld [vmem:[%s3 + $0x2d8] sm:$0xff]
  %v279 = vld [vmem:[%s3 + $0x2e0] sm:$0xff]
  %v280 = vld [vmem:[%s3 + $0x2e8] sm:$0xff]
  %v281 = vld [vmem:[%s3 + $0x2f0] sm:$0xff]
  %v282 = vld [vmem:[%s3 + $0x2f8] sm:$0xff]
  %v283 = vld [vmem:[%s3 + $0x300] sm:$0xff]
  %v284 = vld [vmem:[%s3 + $0x308] sm:$0xff]
  %v285 = vld [vmem:[%s3 + $0x310] sm:$0xff]
  %v286 = vld [vmem:[%s3 + $0x318] sm:$0xff]
  %v287 = vld [vmem:[%s3 + $0x320] sm:$0xff]
  %v288 = vld [vmem:[%s3 + $0x328] sm:$0xff]
  %v289 = vld [vmem:[%s3 + $0x330] sm:$0xff]
  %v290 = vld [vmem:[%s3 + $0x338] sm:$0xff]
  %v291 = vld [vmem:[%s3 + $0x340] sm:$0xff]
  %v292 = vld [vmem:[%s3 + $0x348] sm:$0xff]
  %v293 = vld [vmem:[%s3 + $0x350] sm:$0xff]
  %v294 = vld [vmem:[%s3 + $0x358] sm:$0xff]
  %v295 = vld [vmem:[%s3 + $0x360] sm:$0xff]
  %v296 = vld [vmem:[%s3 + $0x368] sm:$0xff]
  %v297 = vld [vmem:[%s3 + $0x370] sm:$0xff]
  %v298 = vld [vmem:[%s3 + $0x378] sm:$0xff]
  %v299 = vld [vmem:[%s3 + $0x380] sm:$0xff]
  %v300 = vld [vmem:[%s3 + $0x388] sm:$0xff]
  %v301 = vld [vmem:[%s3 + $0x390] sm:$0xff]
  %v302 = vld [vmem:[%s3 + $0x398] sm:$0xff]
  %v303 = vld [vmem:[%s3 + $0x3a0] sm:$0xff]
  %v304 = vld [vmem:[%s3 + $0x3a8] sm:$0xff]
  %v305 = vld [vmem:[%s3 + $0x3b0] sm:$0xff]
  %v306 = vld [vmem:[%s3 + $0x3b8] sm:$0xff]
  %v307 = vld [vmem:[%s3 + $0x3c0] sm:$0xff]
  %v308 = vld [vmem:[%s3 + $0x3c8] sm:$0xff]
  %v309 = vld [vmem:[%s3 + $0x3d0] sm:$0xff]
  %v310 = vld [vmem:[%s3 + $0x3d8] sm:$0xff]
  %v311 = vld [vmem:[%s3 + $0x3e0] sm:$0xff]
  %v312 = vld [vmem:[%s3 + $0x3e8] sm:$0xff]
  %v313 = vld [vmem:[%s3 + $0x3f0] sm:$0xff]
  %v314 = vld [vmem:[%s3 + $0x3f8] sm:$0xff]
  %315 = vmatpush.msra.mxu0 %v202
  %316 = vmatpush.msra.mxu0 %v201
  %317 = vmatpush.msra.mxu0 %v200
  %318 = vmatpush.msra.mxu0 %v199
  %319 = vmatpush.msra.mxu0 %v198
  %320 = vmatpush.msra.mxu0 %v197
  %321 = vmatpush.msra.mxu0 %v196
  %322 = vmatpush.msra.mxu0 %v195
  %323 = vmatpush.msra.mxu0 %v194
  %324 = vmatpush.msra.mxu0 %v193
  %325 = vmatpush.msra.mxu0 %v192
  %326 = vmatpush.msra.mxu0 %v191
  %327 = vmatpush.msra.mxu0 %v190
  %328 = vmatpush.msra.mxu0 %v189
  %329 = vmatpush.msra.mxu0 %v188
  %330 = vmatpush.msra.mxu0 %v187
  %331 = vmatmul.f32.gmra.mxu0 %v180
  %v332 = vpop.f32.mrf.mxu0
  %v333 = vadd.f32 0.0, %v332
  %334 = vdwg.mxu0
  %335 = vmatpush.msra.mxu0 %v218
  %336 = vmatpush.msra.mxu0 %v217
  %337 = vmatpush.msra.mxu0 %v216
  %338 = vmatpush.msra.mxu0 %v215
  %339 = vmatpush.msra.mxu0 %v214
  %340 = vmatpush.msra.mxu0 %v213
  %341 = vmatpush.msra.mxu0 %v212
  %342 = vmatpush.msra.mxu0 %v211
  %343 = vmatpush.msra.mxu0 %v210
  %344 = vmatpush.msra.mxu0 %v209
  %345 = vmatpush.msra.mxu0 %v208
  %346 = vmatpush.msra.mxu0 %v207
  %347 = vmatpush.msra.mxu0 %v206
  %348 = vmatpush.msra.mxu0 %v205
  %349 = vmatpush.msra.mxu0 %v204
  %350 = vmatpush.msra.mxu0 %v203
  %351 = vmatmul.f32.gmra.mxu0 %v181
  %v352 = vpop.f32.mrf.mxu0
  %v353 = vadd.f32 %v333, %v352
  %354 = vdwg.mxu0
  %355 = vmatpush.msra.mxu0 %v234
  %356 = vmatpush.msra.mxu0 %v233
  %357 = vmatpush.msra.mxu0 %v232
  %358 = vmatpush.msra.mxu0 %v231
  %359 = vmatpush.msra.mxu0 %v230
  %360 = vmatpush.msra.mxu0 %v229
  %361 = vmatpush.msra.mxu0 %v228
  %362 = vmatpush.msra.mxu0 %v227
  %363 = vmatpush.msra.mxu0 %v226
  %364 = vmatpush.msra.mxu0 %v225
  %365 = vmatpush.msra.mxu0 %v224
  %366 = vmatpush.msra.mxu0 %v223
  %367 = vmatpush.msra.mxu0 %v222
  %368 = vmatpush.msra.mxu0 %v221
  %369 = vmatpush.msra.mxu0 %v220
  %370 = vmatpush.msra.mxu0 %v219
  %371 = vmatmul.f32.gmra.mxu0 %v182
  %v372 = vpop.f32.mrf.mxu0
  %v373 = vadd.f32 %v353, %v372
  %374 = vdwg.mxu0
  %375 = vmatpush.msra.mxu0 %v250
  %376 = vmatpush.msra.mxu0 %v249
  %377 = vmatpush.msra.mxu0 %v248
  %378 = vmatpush.msra.mxu0 %v247
  %379 = vmatpush.msra.mxu0 %v246
  %380 = vmatpush.msra.mxu0 %v245
  %381 = vmatpush.msra.mxu0 %v244
  %382 = vmatpush.msra.mxu0 %v243
  %383 = vmatpush.msra.mxu0 %v242
  %384 = vmatpush.msra.mxu0 %v241
  %385 = vmatpush.msra.mxu0 %v240
  %386 = vmatpush.msra.mxu0 %v239
  %387 = vmatpush.msra.mxu0 %v238
  %388 = vmatpush.msra.mxu0 %v237
  %389 = vmatpush.msra.mxu0 %v236
  %390 = vmatpush.msra.mxu0 %v235
  %391 = vmatmul.f32.gmra.mxu0 %v183
  %v392 = vpop.f32.mrf.mxu0
  %v393 = vadd.f32 %v373, %v392
  %394 = vdwg.mxu0
  %395 = vmatpush.msra.mxu0 %v266
  %396 = vmatpush.msra.mxu0 %v265
  %397 = vmatpush.msra.mxu0 %v264
  %398 = vmatpush.msra.mxu0 %v263
  %399 = vmatpush.msra.mxu0 %v262
  %400 = vmatpush.msra.mxu0 %v261
  %401 = vmatpush.msra.mxu0 %v260
  %402 = vmatpush.msra.mxu0 %v259
  %403 = vmatpush.msra.mxu0 %v258
  %404 = vmatpush.msra.mxu0 %v257
  %405 = vmatpush.msra.mxu0 %v256
  %406 = vmatpush.msra.mxu0 %v255
  %407 = vmatpush.msra.mxu0 %v254
  %408 = vmatpush.msra.mxu0 %v253
  %409 = vmatpush.msra.mxu0 %v252
  %410 = vmatpush.msra.mxu0 %v251
  %411 = vmatmul.f32.gmra.mxu0 %v184
  %v412 = vpop.f32.mrf.mxu0
  %v413 = vadd.f32 %v393, %v412
  %414 = vdwg.mxu0
  %415 = vmatpush.msra.mxu0 %v282
  %416 = vmatpush.msra.mxu0 %v281
  %417 = vmatpush.msra.mxu0 %v280
  %418 = vmatpush.msra.mxu0 %v279
  %419 = vmatpush.msra.mxu0 %v278
  %420 = vmatpush.msra.mxu0 %v277
  %421 = vmatpush.msra.mxu0 %v276
  %422 = vmatpush.msra.mxu0 %v275
  %423 = vmatpush.msra.mxu0 %v274
  %424 = vmatpush.msra.mxu0 %v273
  %425 = vmatpush.msra.mxu0 %v272
  %426 = vmatpush.msra.mxu0 %v271
  %427 = vmatpush.msra.mxu0 %v270
  %428 = vmatpush.msra.mxu0 %v269
  %429 = vmatpush.msra.mxu0 %v268
  %430 = vmatpush.msra.mxu0 %v267
  %431 = vmatmul.f32.gmra.mxu0 %v185
  %v432 = vpop.f32.mrf.mxu0
  %v433 = vadd.f32 %v413, %v432
  %434 = vdwg.mxu0
  %435 = vmatpush.msra.mxu0 %v298
  %436 = vmatpush.msra.mxu0 %v297
  %437 = vmatpush.msra.mxu0 %v296
  %438 = vmatpush.msra.mxu0 %v295
  %439 = vmatpush.msra.mxu0 %v294
  %440 = vmatpush.msra.mxu0 %v293
  %441 = vmatpush.msra.mxu0 %v292
  %442 = vmatpush.msra.mxu0 %v291
  %443 = vmatpush.msra.mxu0 %v290
  %444 = vmatpush.msra.mxu0 %v289
  %445 = vmatpush.msra.mxu0 %v288
  %446 = vmatpush.msra.mxu0 %v287
  %447 = vmatpush.msra.mxu0 %v286
  %448 = vmatpush.msra.mxu0 %v285
  %449 = vmatpush.msra.mxu0 %v284
  %450 = vmatpush.msra.mxu0 %v283
  %451 = vmatmul.f32.gmra.mxu0 %v186
  %v452 = vpop.f32.mrf.mxu0
  %v453 = vadd.f32 %v433, %v452
  %454 = vdwg.mxu0
  %455 = vmatpush.msra.mxu0 %v314
  %456 = vmatpush.msra.mxu0 %v313
  %457 = vmatpush.msra.mxu0 %v312
  %458 = vmatpush.msra.mxu0 %v311
  %459 = vmatpush.msra.mxu0 %v310
  %460 = vmatpush.msra.mxu0 %v309
  %461 = vmatpush.msra.mxu0 %v308
  %462 = vmatpush.msra.mxu0 %v307
  %463 = vmatpush.msra.mxu0 %v306
  %464 = vmatpush.msra.mxu0 %v305
  %465 = vmatpush.msra.mxu0 %v304
  %466 = vmatpush.msra.mxu0 %v303
  %467 = vmatpush.msra.mxu0 %v302
  %468 = vmatpush.msra.mxu0 %v301
  %469 = vmatpush.msra.mxu0 %v300
  %470 = vmatpush.msra.mxu0 %v299
  %471 = vmatmul.f32.gmra.mxu0 %v142
  %v472 = vpop.f32.mrf.mxu0
  %v473 = vadd.f32 %v453, %v472
  %474 = vdwg.mxu0
  %v475 = vmul.f32 %v473, 0.14285715
  %v476 = vld [vmem:[%s4 + $0x28] sm:$0x1]
  %v477 = vperm.slane %v476, 0
  %v478 = vadd.f32 %v475, %v477
  %v479 = vtanh.pop %v478
  %v480 = vld [vmem:[%s4] sm:$0xff]
  %v481 = vld [vmem:[%s4 + $0x8] sm:$0xff]
  %v482 = vld [vmem:[%s4 + $0x10] sm:$0xff]
  %v483 = vld [vmem:[%s4 + $0x18] sm:$0xff]
  %v484 = vld [vmem:[%s4 + $0x20] sm:$0xff]
  %vm485 = vcmask 326656
  %v487 = vsel %vm485, %v479, 0
  %489 = vmatpush.msra.mxu0 0.0
  %490 = vmatpush.msra.mxu0 0.0
  %491 = vmatpush.msra.mxu0 0.0
  %492 = vmatpush.msra.mxu0 0.0
  %493 = vmatpush.msra.mxu0 0.0
  %494 = vmatpush.msra.mxu0 0.0
  %495 = vmatpush.msra.mxu0 0.0
  %496 = vmatpush.msra.mxu0 0.0
  %497 = vmatpush.msra.mxu0 0.0
  %498 = vmatpush.msra.mxu0 0.0
  %499 = vmatpush.msra.mxu0 0.0
  %500 = vmatpush.msra.mxu0 %v484
  %501 = vmatpush.msra.mxu0 %v483
  %502 = vmatpush.msra.mxu0 %v482
  %503 = vmatpush.msra.mxu0 %v481
  %504 = vmatpush.msra.mxu0 %v480
  %505 = vmatmul.f32.gmra.mxu0 %v487
  %v506 = vpop.f32.mrf.mxu0
  %v507 = vadd.f32 0.0, %v506
  %508 = vdwg.mxu0
  %v509 = vadd.f32 %v473, %v507
  %v510 = vld [vmem:[%s4 + $0x29] sm:$0x1]
  %v511 = vperm.slane %v510, 0
  %v512 = vadd.f32 %v509, %v511
  %v513 = vtanh.pop %v512
  %v514 = vld [vmem:[%s4 + $0x2a] sm:$0x1]
  %v515 = vperm.slane %v514, 0
  %v516 = vmul.f32 %v513, %v515
  %vm517 = vcmask 162816
  %v518 = vsel %vm517, %v516, 0.0
  %519 = vadd.xlane.f32.xlu0 %v518
  %v520 = vpop.xlane.xlu0 %519
  %v521 = vld [vmem:[%s4 + $0x2b] sm:$0x1]
  %v522 = vperm.slane %v521, 0
  %v523 = vadd.f32 %v520, %v522
  %vm524 = vcmask 7168
  %525 = vst.msk [vmem:[%s5] sm:$0xff] %vm524, %v523
  // Predicated region
  $region22: #{scheduler_forward.1} parent=0 // pred_check
    _
  $region23: #{scheduler_forward.1} parent=0 // pred_check_branch
    %527 = sbr.rel (0) target = $region25
  $region24: #{scheduler_forward.1} parent=0 // pred_region
    _
  $region25: #{scheduler_forward.1} parent=0 // pred_fallthru
    _
  // Predicated region
  $region26: #{scheduler_forward.1} parent=0 // pred_check
    _
  $region27: #{scheduler_forward.1} parent=0 // pred_check_branch
    %529 = sbr.rel (0) target = $region29
  $region28: #{scheduler_forward.1} parent=0 // pred_region
    _
  $region29: #{scheduler_forward.1} parent=0 // pred_fallthru
    _

</llo_original>
